<compile_context>
chip_gen: v5e
topology: v5e:2x2
jax: 0.10.0
libtpu: 0.0.40
codegen_flags: <defaults>
</compile_context>

<pallas_src>
import functools

import jax
import jax.numpy as jnp
from jax import lax
from jax.experimental import pallas as pl
from jax.experimental.pallas import tpu as pltpu

_VMEM_LIMIT_BYTES = 48 * 1024 * 1024


# -----------------------------------------------------------------------------
# Static tiling helpers (pure Python, evaluated in the wrapper at trace time).
# -----------------------------------------------------------------------------
def _divisors(n):
    return [d for d in range(1, n + 1) if n % d == 0]


def _largest_divisor_at_most(n, cap):
    cap = max(1, min(n, cap))
    for d in range(cap, 0, -1):
        if n % d == 0:
            return d
    return 1


def _choose_lane_width(cg, hw):
    """Factor each group's spatial extent HW = Hr * L with L on the lane axis.

    Prefers L % 128 == 0 (unmasked vst) and minimizes vreg sublane waste of the
    per-group (Cg*Hr, L) tile; ties broken toward a moderate lane width.
    """
    cands = [d for d in range(128, hw + 1, 128) if hw % d == 0]
    if not cands:
        # TODO(synk): pad/mask ragged spatial sizes instead of accepting a
        # non-128-multiple lane dim (masked partial stores).
        return hw

    def vreg_waste(lw):
        rows = cg * (hw // lw)
        return (-(-rows // 8) * 8 - rows) * lw

    return min(cands, key=lambda lw: (vreg_waste(lw), abs(lw - 512)))


def _pick_chunk_rows(rows, row_bytes_f32, chunk_bytes):
    """Rows per in-kernel pass chunk.

    A multiple-of-8 divisor of `rows` near the chunk byte target (bounds the
    live f32 temporary without misaligned sublane offsets); else no chunking.
    """
    divs8 = [d for d in _divisors(rows) if d % 8 == 0]
    if not divs8:
        return rows
    target = max(8, chunk_bytes // max(1, row_bytes_f32))
    fit = [d for d in divs8 if d <= target]
    return max(fit) if fit else min(divs8)


def _pick_split_rows(rows, row_bytes, target_bytes):
    """Rows per grid block for the large-group (non-resident) path."""
    cands = [d for d in _divisors(rows) if d % 8 == 0] or [rows]
    fit = [d for d in cands if d * row_bytes <= target_bytes]
    return max(fit) if fit else min(cands)


# -----------------------------------------------------------------------------
# Path A kernel: whole group(s) resident in VMEM per grid step.
# -----------------------------------------------------------------------------
def _gn_resident_kernel(x_ref, g_ref, b_ref, o_ref, *, eps, m, rc, nchunks):
    # x_ref block: (Nb, Gb, R, L)   gamma/beta blocks: (1, Gb, R, 1)
    nb, gb = x_ref.shape[0], x_ref.shape[1]
    unroll = nchunks <= 8
    zero = jnp.zeros((nb, gb, 1, 1), jnp.float32)

    # ---- Pass 1: per-group mean (chunked: no full-block f32 temporary). ----
    def _sum_body(c, acc):
        xc = x_ref[:, :, pl.ds(c * rc, rc), :].astype(jnp.float32)
        row_s = jnp.sum(xc, axis=3, keepdims=True)
        return acc + jnp.sum(row_s, axis=2, keepdims=True)

    mean = lax.fori_loop(0, nchunks, _sum_body, zero, unroll=unroll) * (1.0 / m)

    # ---- Pass 2: centered sum of squares (two-pass variance). ----
    def _ss_body(c, acc):
        xc = x_ref[:, :, pl.ds(c * rc, rc), :].astype(jnp.float32)
        d = xc - mean
        row_s = jnp.sum(d * d, axis=3, keepdims=True)
        return acc + jnp.sum(row_s, axis=2, keepdims=True)

    ss = lax.fori_loop(0, nchunks, _ss_body, zero, unroll=unroll)

    var = ss * (1.0 / (m - 1))            # unbiased (torch.std default)
    inv = pl.reciprocal(jnp.sqrt(var) + jnp.float32(eps), approx=False)

    # ---- Pass 3: load -> fma -> store; affine folded into per-row scale/bias. ----
    def _out_body(c, carry):
        rows = pl.ds(c * rc, rc)
        xc = x_ref[:, :, rows, :].astype(jnp.float32)           # (Nb,Gb,rc,L)
        scale = g_ref[:, :, rows, :].astype(jnp.float32) * inv  # (Nb,Gb,rc,1)
        bias = b_ref[:, :, rows, :].astype(jnp.float32) - mean * scale
        o_ref[:, :, rows, :] = (xc * scale + bias).astype(o_ref.dtype)
        return carry

    lax.fori_loop(0, nchunks, _out_body, jnp.int32(0), unroll=unroll)


# -----------------------------------------------------------------------------
# Path B kernels: group too large for VMEM -> stats sweep, then normalize sweep.
# -----------------------------------------------------------------------------
def _gn_stats_kernel(x_ref, sum_ref, ssq_ref, *, rc, nchunks):
    # x_ref block: (1, 1, Rk, L); outputs are per-(n, g) accumulators.
    @pl.when(pl.program_id(2) == 0)
    def _():
        sum_ref[...] = jnp.zeros_like(sum_ref)
        ssq_ref[...] = jnp.zeros_like(ssq_ref)

    unroll = nchunks <= 8
    zero = jnp.zeros((1, 1, 1, 1), jnp.float32)

    def _body(c, carry):
        s_acc, ss_acc = carry
        xc = x_ref[:, :, pl.ds(c * rc, rc), :].astype(jnp.float32)
        s_acc = s_acc + jnp.sum(jnp.sum(xc, axis=3, keepdims=True),
                                axis=2, keepdims=True)
        ss_acc = ss_acc + jnp.sum(jnp.sum(xc * xc, axis=3, keepdims=True),
                                  axis=2, keepdims=True)
        return (s_acc, ss_acc)

    s, ss = lax.fori_loop(0, nchunks, _body, (zero, zero), unroll=unroll)
    sum_ref[...] += s
    ssq_ref[...] += ss


def _gn_norm_kernel(x_ref, g_ref, b_ref, sum_ref, ssq_ref, o_ref, *, eps, m):
    s = sum_ref[...]                                            # (1,1,1,1) f32
    mean = s * (1.0 / m)
    # Single-read stats for the non-resident path; clamp guards cancellation.
    var = jnp.maximum(ssq_ref[...] - s * mean, 0.0) * (1.0 / (m - 1))
    inv = pl.reciprocal(jnp.sqrt(var) + jnp.float32(eps), approx=False)
    scale = g_ref[...].astype(jnp.float32) * inv                # (1,1,Rk,1)
    bias = b_ref[...].astype(jnp.float32) - mean * scale
    o_ref[...] = (x_ref[...].astype(jnp.float32) * scale + bias).astype(o_ref.dtype)


# -----------------------------------------------------------------------------
# Wrapper.
# -----------------------------------------------------------------------------
def group_norm_2d(x, gamma, beta, *, group_num=32, eps=1e-10,
                  block_target_bytes=2 << 20, chunk_bytes=1 << 20,
                  max_resident_bytes=6 << 20):
    """GroupNorm2d forward. x: (N, C, H, W); gamma/beta: (C, 1, 1)."""
    n, c, h, w = x.shape
    g = group_num
    assert c % g == 0, "channel num must be divisible by group num"
    cg = c // g
    hw = h * w
    m = cg * hw
    assert m > 1, "group must contain more than one element (unbiased std)"

    lanes = _choose_lane_width(cg, hw)
    hr = hw // lanes
    rows = cg * hr                              # rows per group (sublane axis)
    itemsize = jnp.dtype(x.dtype).itemsize
    group_bytes = rows * lanes * itemsize

    # Contiguous (free) metadata reshapes; lane-dense last dim.
    x_r = x.reshape(n, g, rows, lanes)
    gamma_rows = jnp.repeat(jnp.reshape(gamma, (g, cg)), hr, axis=1).reshape(1, g, rows, 1)
    beta_rows = jnp.repeat(jnp.reshape(beta, (g, cg)), hr, axis=1).reshape(1, g, rows, 1)

    if group_bytes <= max_resident_bytes:
        # ---------------- Path A: resident group(s), fused per grid step. ----
        gb = _largest_divisor_at_most(g, max(1, block_target_bytes // group_bytes))
        nb = _largest_divisor_at_most(n, max(1, block_target_bytes // (gb * group_bytes)))
        rc = _pick_chunk_rows(rows, nb * gb * lanes * 4, chunk_bytes)
        nchunks = rows // rc

        kernel = functools.partial(_gn_resident_kernel, eps=float(eps), m=m,
                                   rc=rc, nchunks=nchunks)
        out_r = pl.pallas_call(
            kernel,
            out_shape=jax.ShapeDtypeStruct((n, g, rows, lanes), x.dtype),
            grid_spec=pltpu.PrefetchScalarGridSpec(
                num_scalar_prefetch=0,
                # G on the outer axis, N inner: gamma/beta block index is
                # constant along the inner axis, so their DMA is elided.
                grid=(g // gb, n // nb),
                in_specs=[
                    pl.BlockSpec((nb, gb, rows, lanes), lambda gi, ni: (ni, gi, 0, 0)),
                    pl.BlockSpec((1, gb, rows, 1), lambda gi, ni: (0, gi, 0, 0)),
                    pl.BlockSpec((1, gb, rows, 1), lambda gi, ni: (0, gi, 0, 0)),
                ],
                out_specs=pl.BlockSpec((nb, gb, rows, lanes),
                                       lambda gi, ni: (ni, gi, 0, 0)),
            ),
            compiler_params=pltpu.CompilerParams(
                dimension_semantics=("parallel", "parallel"),
                vmem_limit_bytes=_VMEM_LIMIT_BYTES,
            ),
        )(x_r, gamma_rows, beta_rows)
        return out_r.reshape(n, c, h, w)

    # ---------------- Path B: split the group's rows across a grid axis. ----
    rk = _pick_split_rows(rows, lanes * itemsize, block_target_bytes)
    ksteps = rows // rk
    rc = _pick_chunk_rows(rk, lanes * 4, chunk_bytes)
    nchunks = rk // rc

    stats_kernel = functools.partial(_gn_stats_kernel, rc=rc, nchunks=nchunks)
    sums, ssqs = pl.pallas_call(
        stats_kernel,
        out_shape=(jax.ShapeDtypeStruct((n, g, 1, 1), jnp.float32),
                   jax.ShapeDtypeStruct((n, g, 1, 1), jnp.float32)),
        grid_spec=pltpu.PrefetchScalarGridSpec(
            num_scalar_prefetch=0,
            grid=(n, g, ksteps),
            in_specs=[
                pl.BlockSpec((1, 1, rk, lanes), lambda ni, gi, ki: (ni, gi, ki, 0)),
            ],
            out_specs=(
                pl.BlockSpec((1, 1, 1, 1), lambda ni, gi, ki: (ni, gi, 0, 0)),
                pl.BlockSpec((1, 1, 1, 1), lambda ni, gi, ki: (ni, gi, 0, 0)),
            ),
        ),
        compiler_params=pltpu.CompilerParams(
            dimension_semantics=("parallel", "parallel", "arbitrary"),
            vmem_limit_bytes=_VMEM_LIMIT_BYTES,
        ),
    )(x_r)

    norm_kernel = functools.partial(_gn_norm_kernel, eps=float(eps), m=m)
    out_r = pl.pallas_call(
        norm_kernel,
        out_shape=jax.ShapeDtypeStruct((n, g, rows, lanes), x.dtype),
        grid_spec=pltpu.PrefetchScalarGridSpec(
            num_scalar_prefetch=0,
            grid=(n, g, ksteps),
            in_specs=[
                pl.BlockSpec((1, 1, rk, lanes), lambda ni, gi, ki: (ni, gi, ki, 0)),
                pl.BlockSpec((1, 1, rk, 1), lambda ni, gi, ki: (0, gi, ki, 0)),
                pl.BlockSpec((1, 1, rk, 1), lambda ni, gi, ki: (0, gi, ki, 0)),
                pl.BlockSpec((1, 1, 1, 1), lambda ni, gi, ki: (ni, gi, 0, 0)),
                pl.BlockSpec((1, 1, 1, 1), lambda ni, gi, ki: (ni, gi, 0, 0)),
            ],
            out_specs=pl.BlockSpec((1, 1, rk, lanes),
                                   lambda ni, gi, ki: (ni, gi, ki, 0)),
        ),
        compiler_params=pltpu.CompilerParams(
            dimension_semantics=("parallel", "parallel", "arbitrary"),
            vmem_limit_bytes=_VMEM_LIMIT_BYTES,
        ),
    )(x_r, gamma_rows, beta_rows, sums, ssqs)
    return out_r.reshape(n, c, h, w)


# -----------------------------------------------------------------------------
# Pure-JAX reference (mirrors the PyTorch module exactly).
# -----------------------------------------------------------------------------
def _reference(x, gamma, beta, group_num, eps):
    n, c, h, w = x.shape
    xg = x.reshape(n, group_num, -1).astype(jnp.float32)
    mean = jnp.mean(xg, axis=2, keepdims=True)
    mm = xg.shape[2]
    var = jnp.sum((xg - mean) ** 2, axis=2, keepdims=True) / (mm - 1)
    xn = (xg - mean) / (jnp.sqrt(var) + eps)
    xn = xn.reshape(n, c, h, w)
    return xn * gamma.reshape(1, c, 1, 1) + beta.reshape(1, c, 1, 1)


if __name__ == "__main__":
    key = jax.random.PRNGKey(0)
    k1, k2, k3, k4 = jax.random.split(key, 4)

    # 1) Module-consistent small case: N=2, C=4, H=W=16, group_num=2,
    #    parameters as in GroupNorm2d.__init__ (zero_gamma=False).
    x1 = jax.random.normal(k1, (2, 4, 16, 16), dtype=jnp.float32)
    g1 = jnp.ones((4, 1, 1), jnp.float32)
    b1 = jnp.zeros((4, 1, 1), jnp.float32)
    o1 = jax.block_until_ready(group_norm_2d(x1, g1, b1, group_num=2, eps=1e-10))
    r1 = _reference(x1, g1, b1, 2, 1e-10)
    assert o1.shape == x1.shape
    assert jnp.allclose(o1, r1, atol=1e-4, rtol=1e-4), "mismatch (resident path)"

    # 2) Exercise the chunked in-kernel passes (nchunks > 1) and a non-trivial
    #    affine on a slightly larger channel count.
    x2 = jax.random.normal(k2, (2, 16, 16, 16), dtype=jnp.float32) * 3.0 + 1.5
    g2 = jax.random.normal(k3, (16, 1, 1), dtype=jnp.float32)
    b2 = jax.random.normal(k4, (16, 1, 1), dtype=jnp.float32)
    o2 = jax.block_until_ready(
        group_norm_2d(x2, g2, b2, group_num=2, eps=1e-10, chunk_bytes=4 * 1024))
    r2 = _reference(x2, g2, b2, 2, 1e-10)
    assert jnp.allclose(o2, r2, atol=1e-4, rtol=1e-4), "mismatch (chunked path)"

    # 3) Exercise the large-group split path (Path B) by shrinking the budgets.
    o3 = jax.block_until_ready(
        group_norm_2d(x2, g2, b2, group_num=2, eps=1e-10,
                      block_target_bytes=4 * 1024, max_resident_bytes=4 * 1024))
    assert jnp.allclose(o3, r2, atol=1e-4, rtol=1e-4), "mismatch (split path)"

    print("KERNEL_OK")
</pallas_src>

<mosaic_0001>
module attributes {stable_mosaic.version = 11 : i64} {
  func.func @_gn_resident_kernel(%arg0: i32, %arg1: i32, %arg2: memref<2x2x4x128xf32, #tpu.memory_space<vmem>>, %arg3: memref<1x2x4x1xf32, #tpu.memory_space<vmem>>, %arg4: memref<1x2x4x1xf32, #tpu.memory_space<vmem>>, %arg5: memref<2x2x4x128xf32, #tpu.memory_space<vmem>>) attributes {dimension_semantics = [#tpu.dimension_semantics<parallel>, #tpu.dimension_semantics<parallel>], iteration_bounds = array<i64: 1, 1>, scalar_prefetch = 0 : i64, scratch_operands = 0 : i64, tpu.core_type = #tpu.core_type<tc>, window_params = [{transform_indices = @transform_0, window_bounds = array<i64: 2, 2, 4, 128>}, {transform_indices = @transform_1, window_bounds = array<i64: 1, 2, 4, 1>}, {transform_indices = @transform_2, window_bounds = array<i64: 1, 2, 4, 1>}, {transform_indices = @transform_3, window_bounds = array<i64: 2, 2, 4, 128>}]} {
    %cst = arith.constant 0.000000e+00 : f32
    %0 = vector.broadcast %cst : f32 to vector<2x2x1x1xf32>
    %c0_i32 = arith.constant 0 : i32
    %c4_i32 = arith.constant 4 : i32
    %1 = arith.muli %c0_i32, %c4_i32 : i32
    %c0 = arith.constant 0 : index
    %c0_0 = arith.constant 0 : index
    %2 = arith.index_cast %1 : i32 to index
    %c0_1 = arith.constant 0 : index
    %3 = vector.load %arg2[%c0, %c0_0, %2, %c0_1] : memref<2x2x4x128xf32, #tpu.memory_space<vmem>>, vector<2x2x4x128xf32>
    %cst_2 = arith.constant dense<0.000000e+00> : vector<2x2x4xf32>
    %4 = vector.multi_reduction <add>, %3, %cst_2 [3] : vector<2x2x4x128xf32> to vector<2x2x4xf32>
    %5 = vector.shape_cast %4 : vector<2x2x4xf32> to vector<2x2x4x1xf32>
    %cst_3 = arith.constant dense<0.000000e+00> : vector<2x2x1xf32>
    %6 = vector.multi_reduction <add>, %5, %cst_3 [2] : vector<2x2x4x1xf32> to vector<2x2x1xf32>
    %7 = vector.shape_cast %6 : vector<2x2x1xf32> to vector<2x2x1x1xf32>
    %8 = arith.addf %0, %7 : vector<2x2x1x1xf32>
    %c1_i32 = arith.constant 1 : i32
    %cst_4 = arith.constant 0.001953125 : f32
    %9 = vector.broadcast %cst_4 : f32 to vector<2x2x1x1xf32>
    %10 = arith.mulf %8, %9 : vector<2x2x1x1xf32>
    %c0_i32_5 = arith.constant 0 : i32
    %c4_i32_6 = arith.constant 4 : i32
    %11 = arith.muli %c0_i32_5, %c4_i32_6 : i32
    %c0_7 = arith.constant 0 : index
    %c0_8 = arith.constant 0 : index
    %12 = arith.index_cast %11 : i32 to index
    %c0_9 = arith.constant 0 : index
    %13 = vector.load %arg2[%c0_7, %c0_8, %12, %c0_9] : memref<2x2x4x128xf32, #tpu.memory_space<vmem>>, vector<2x2x4x128xf32>
    %14 = vector.broadcast %10 : vector<2x2x1x1xf32> to vector<2x2x4x128xf32>
    %15 = arith.subf %13, %14 : vector<2x2x4x128xf32>
    %16 = arith.mulf %15, %15 : vector<2x2x4x128xf32>
    %cst_10 = arith.constant dense<0.000000e+00> : vector<2x2x4xf32>
    %17 = vector.multi_reduction <add>, %16, %cst_10 [3] : vector<2x2x4x128xf32> to vector<2x2x4xf32>
    %18 = vector.shape_cast %17 : vector<2x2x4xf32> to vector<2x2x4x1xf32>
    %cst_11 = arith.constant dense<0.000000e+00> : vector<2x2x1xf32>
    %19 = vector.multi_reduction <add>, %18, %cst_11 [2] : vector<2x2x4x1xf32> to vector<2x2x1xf32>
    %20 = vector.shape_cast %19 : vector<2x2x1xf32> to vector<2x2x1x1xf32>
    %21 = arith.addf %0, %20 : vector<2x2x1x1xf32>
    %c1_i32_12 = arith.constant 1 : i32
    %cst_13 = arith.constant 0.00195694715 : f32
    %22 = vector.broadcast %cst_13 : f32 to vector<2x2x1x1xf32>
    %23 = arith.mulf %21, %22 : vector<2x2x1x1xf32>
    %24 = math.sqrt %23 : vector<2x2x1x1xf32>
    %cst_14 = arith.constant 1.000000e-10 : f32
    %25 = vector.broadcast %cst_14 : f32 to vector<2x2x1x1xf32>
    %26 = arith.addf %24, %25 : vector<2x2x1x1xf32>
    %27 = tpu.reciprocal %26 : vector<2x2x1x1xf32> -> vector<2x2x1x1xf32>
    %c0_i32_15 = arith.constant 0 : i32
    %c4_i32_16 = arith.constant 4 : i32
    %28 = arith.muli %c0_i32_15, %c4_i32_16 : i32
    %c0_17 = arith.constant 0 : index
    %c0_18 = arith.constant 0 : index
    %29 = arith.index_cast %28 : i32 to index
    %c0_19 = arith.constant 0 : index
    %30 = vector.load %arg2[%c0_17, %c0_18, %29, %c0_19] : memref<2x2x4x128xf32, #tpu.memory_space<vmem>>, vector<2x2x4x128xf32>
    %c0_20 = arith.constant 0 : index
    %c0_21 = arith.constant 0 : index
    %31 = arith.index_cast %28 : i32 to index
    %c0_22 = arith.constant 0 : index
    %32 = vector.load %arg3[%c0_20, %c0_21, %31, %c0_22] : memref<1x2x4x1xf32, #tpu.memory_space<vmem>>, vector<1x2x4x1xf32>
    %33 = vector.broadcast %32 : vector<1x2x4x1xf32> to vector<2x2x4x1xf32>
    %34 = vector.broadcast %27 : vector<2x2x1x1xf32> to vector<2x2x4x1xf32>
    %35 = arith.mulf %33, %34 : vector<2x2x4x1xf32>
    %c0_23 = arith.constant 0 : index
    %c0_24 = arith.constant 0 : index
    %36 = arith.index_cast %28 : i32 to index
    %c0_25 = arith.constant 0 : index
    %37 = vector.load %arg4[%c0_23, %c0_24, %36, %c0_25] : memref<1x2x4x1xf32, #tpu.memory_space<vmem>>, vector<1x2x4x1xf32>
    %38 = vector.broadcast %10 : vector<2x2x1x1xf32> to vector<2x2x4x1xf32>
    %39 = arith.mulf %38, %35 : vector<2x2x4x1xf32>
    %40 = vector.broadcast %37 : vector<1x2x4x1xf32> to vector<2x2x4x1xf32>
    %41 = arith.subf %40, %39 : vector<2x2x4x1xf32>
    %42 = vector.broadcast %35 : vector<2x2x4x1xf32> to vector<2x2x4x128xf32>
    %43 = arith.mulf %30, %42 : vector<2x2x4x128xf32>
    %44 = vector.broadcast %41 : vector<2x2x4x1xf32> to vector<2x2x4x128xf32>
    %45 = arith.addf %43, %44 : vector<2x2x4x128xf32>
    %c0_26 = arith.constant 0 : index
    %c0_27 = arith.constant 0 : index
    %46 = arith.index_cast %28 : i32 to index
    %c0_28 = arith.constant 0 : index
    %47 = vector.load %arg5[%c0_26, %c0_27, %46, %c0_28] : memref<2x2x4x128xf32, #tpu.memory_space<vmem>>, vector<2x2x4x128xf32>
    tpu.vector_store %arg5[%c0_26, %c0_27, %46, %c0_28], %45 {strides = array<i32>} : memref<2x2x4x128xf32, #tpu.memory_space<vmem>>, vector<2x2x4x128xf32>,
    %c1_i32_29 = arith.constant 1 : i32
    return
  }
  func.func @transform_0(%arg0: i32, %arg1: i32) -> (i32, i32, i32, i32) {
    %c0_i32 = arith.constant 0 : i32
    %c0_i32_0 = arith.constant 0 : i32
    %c0_i32_1 = arith.constant 0 : i32
    return %arg1, %arg0, %c0_i32, %c0_i32_0 : i32, i32, i32, i32
  }
  func.func @transform_1(%arg0: i32, %arg1: i32) -> (i32, i32, i32, i32) {
    %c0_i32 = arith.constant 0 : i32
    %c0_i32_0 = arith.constant 0 : i32
    %c0_i32_1 = arith.constant 0 : i32
    %c0_i32_2 = arith.constant 0 : i32
    return %c0_i32, %arg0, %c0_i32_0, %c0_i32_1 : i32, i32, i32, i32
  }
  func.func @transform_2(%arg0: i32, %arg1: i32) -> (i32, i32, i32, i32) {
    %c0_i32 = arith.constant 0 : i32
    %c0_i32_0 = arith.constant 0 : i32
    %c0_i32_1 = arith.constant 0 : i32
    %c0_i32_2 = arith.constant 0 : i32
    return %c0_i32, %arg0, %c0_i32_0, %c0_i32_1 : i32, i32, i32, i32
  }
  func.func @transform_3(%arg0: i32, %arg1: i32) -> (i32, i32, i32, i32) {
    %c0_i32 = arith.constant 0 : i32
    %c0_i32_0 = arith.constant 0 : i32
    %c0_i32_1 = arith.constant 0 : i32
    return %arg1, %arg0, %c0_i32, %c0_i32_0 : i32, i32, i32, i32
  }
}

</mosaic_0001>

<llo_original>
// kernel: tpu_custom_call.1
$region0: #{tpu_custom_call.1}
  #allocation0 [shape = 'u32[]', space=smem, size = 0x4, offset = 0x4, fixed_abs, tag = 'smem constant byte address 0x4 - core index']
  #allocation1 [shape = 'u32[72,128]{1,0:T(1,128)}', space=vmem, size = 0x9000, scoped, tag = 'internal scratch']
  %s0 = inlined_call_operand.vmem [shape: f32[2,2,4,128], index: 0, kind: input, shape index: {}]
  %s1 = inlined_call_operand.vmem [shape: f32[1,2,4,1], index: 1, kind: input, shape index: {}]
  %s2 = inlined_call_operand.vmem [shape: f32[1,2,4,1], index: 2, kind: input, shape index: {}]
  %s3 = inlined_call_operand.hbm [shape: f32[2,2,4,128], index: 3, kind: output, shape index: {}]
  %s4 = sld [smem:[#allocation0]]
  $region22: #{tpu_custom_call.1} parent=0
    _
  %s6 = ssub.s32 1, %s4
  %s7 = scalar_select 0, %s6, %s4
  $region1: #{tpu_custom_call.1} parent=0
    #allocation2 [shape = 'u8[8192]{0}', space=vmem, size = 0x2000, scoped, tag = 'output window, operand 0, single buffered']
    #allocation3 [shape = 's32[1]{0}', space=sflag, size = 0x4, scoped, tag = 'scoped memory for tpu_custom_call.1']
    %8 = vsyncpa [#allocation3], 0
    // Predicated region
    $region2: #{tpu_custom_call.1} parent=1 // pred_check
      _
    $region3: #{tpu_custom_call.1} parent=1 // pred_check_branch
      %10 = sbr.rel (0) target = $region5
    $region4: #{tpu_custom_call.1} parent=1 // pred_region
      _
    $region5: #{tpu_custom_call.1} parent=1 // pred_fallthru
      _
    // Predicated region
    $region6: #{tpu_custom_call.1} parent=1 // pred_check
      _
    $region7: #{tpu_custom_call.1} parent=1 // pred_check_branch
      %12 = sbr.rel (0) target = $region9
    $region8: #{tpu_custom_call.1} parent=1 // pred_region
      _
    $region9: #{tpu_custom_call.1} parent=1 // pred_fallthru
      _
    // Predicated region
    $region10: #{tpu_custom_call.1} parent=1 // pred_check
      _
    $region11: #{tpu_custom_call.1} parent=1 // pred_check_branch
      %14 = sbr.rel (0) target = $region13
    $region12: #{tpu_custom_call.1} parent=1 // pred_region
      _
    $region13: #{tpu_custom_call.1} parent=1 // pred_fallthru
      _
    %v15 = vld [vmem:[%s0] sm:$0xf]
    %v16 = vld [vmem:[%s0 + $0x4] sm:$0xf]
    %v17 = vld [vmem:[%s0 + $0x8] sm:$0xf]
    %v18 = vld [vmem:[%s0 + $0xc] sm:$0xf]
    %vm19 = vcmask 1043456
    %v20 = vsel %vm19, %v15, 0.0
    %21 = vadd.xlane.f32.xlu0 %v20
    %v22 = vpop.xlane.xlu0 %21
    %v23 = vsel %vm19, %v16, 0.0
    %24 = vadd.xlane.f32.xlu0 %v23
    %v25 = vpop.xlane.xlu0 %24
    %v26 = vsel %vm19, %v17, 0.0
    %27 = vadd.xlane.f32.xlu0 %v26
    %v28 = vpop.xlane.xlu0 %27
    %v29 = vsel %vm19, %v18, 0.0
    %30 = vadd.xlane.f32.xlu0 %v29
    %v31 = vpop.xlane.xlu0 %30
    %v32 = vsel %vm19, %v22, 0.0
    %v33 = vrot.slane %v32, 4
    %v34 = vadd.f32 %v32, %v33
    %v35 = vrot.slane %v34, 2
    %v36 = vadd.f32 %v34, %v35
    %v37 = vrot.slane %v36, 1
    %v38 = vadd.f32 %v36, %v37
    %v39 = vsel %vm19, %v25, 0.0
    %v40 = vrot.slane %v39, 4
    %v41 = vadd.f32 %v39, %v40
    %v42 = vrot.slane %v41, 2
    %v43 = vadd.f32 %v41, %v42
    %v44 = vrot.slane %v43, 1
    %v45 = vadd.f32 %v43, %v44
    %v46 = vsel %vm19, %v28, 0.0
    %v47 = vrot.slane %v46, 4
    %v48 = vadd.f32 %v46, %v47
    %v49 = vrot.slane %v48, 2
    %v50 = vadd.f32 %v48, %v49
    %v51 = vrot.slane %v50, 1
    %v52 = vadd.f32 %v50, %v51
    %v53 = vsel %vm19, %v31, 0.0
    %v54 = vrot.slane %v53, 4
    %v55 = vadd.f32 %v53, %v54
    %v56 = vrot.slane %v55, 2
    %v57 = vadd.f32 %v55, %v56
    %v58 = vrot.slane %v57, 1
    %v59 = vadd.f32 %v57, %v58
    %v60 = vadd.f32 %v38, 0.0
    %v61 = vadd.f32 %v45, 0.0
    %v62 = vadd.f32 %v52, 0.0
    %v63 = vadd.f32 %v59, 0.0
    %v64 = vmul.f32 %v60, 0.001953125
    %v65 = vmul.f32 %v61, 0.001953125
    %v66 = vmul.f32 %v62, 0.001953125
    %v67 = vmul.f32 %v63, 0.001953125
    %v68 = vsub.f32 %v15, %v64
    %v69 = vsub.f32 %v16, %v65
    %v70 = vsub.f32 %v17, %v66
    %v71 = vsub.f32 %v18, %v67
    %v72 = vmul.f32 %v68, %v68
    %v73 = vmul.f32 %v69, %v69
    %v74 = vmul.f32 %v70, %v70
    %v75 = vmul.f32 %v71, %v71
    %v76 = vsel %vm19, %v72, 0.0
    %77 = vadd.xlane.f32.xlu0 %v76
    %v78 = vpop.xlane.xlu0 %77
    %v79 = vsel %vm19, %v73, 0.0
    %80 = vadd.xlane.f32.xlu0 %v79
    %v81 = vpop.xlane.xlu0 %80
    %v82 = vsel %vm19, %v74, 0.0
    %83 = vadd.xlane.f32.xlu0 %v82
    %v84 = vpop.xlane.xlu0 %83
    %v85 = vsel %vm19, %v75, 0.0
    %86 = vadd.xlane.f32.xlu0 %v85
    %v87 = vpop.xlane.xlu0 %86
    %v88 = vsel %vm19, %v78, 0.0
    %v89 = vrot.slane %v88, 4
    %v90 = vadd.f32 %v88, %v89
    %v91 = vrot.slane %v90, 2
    %v92 = vadd.f32 %v90, %v91
    %v93 = vrot.slane %v92, 1
    %v94 = vadd.f32 %v92, %v93
    %v95 = vsel %vm19, %v81, 0.0
    %v96 = vrot.slane %v95, 4
    %v97 = vadd.f32 %v95, %v96
    %v98 = vrot.slane %v97, 2
    %v99 = vadd.f32 %v97, %v98
    %v100 = vrot.slane %v99, 1
    %v101 = vadd.f32 %v99, %v100
    %v102 = vsel %vm19, %v84, 0.0
    %v103 = vrot.slane %v102, 4
    %v104 = vadd.f32 %v102, %v103
    %v105 = vrot.slane %v104, 2
    %v106 = vadd.f32 %v104, %v105
    %v107 = vrot.slane %v106, 1
    %v108 = vadd.f32 %v106, %v107
    %v109 = vsel %vm19, %v87, 0.0
    %v110 = vrot.slane %v109, 4
    %v111 = vadd.f32 %v109, %v110
    %v112 = vrot.slane %v111, 2
    %v113 = vadd.f32 %v111, %v112
    %v114 = vrot.slane %v113, 1
    %v115 = vadd.f32 %v113, %v114
    %v116 = vadd.f32 %v94, 0.0
    %v117 = vadd.f32 %v101, 0.0
    %v118 = vadd.f32 %v108, 0.0
    %v119 = vadd.f32 %v115, 0.0
    %v120 = vmul.f32 %v116, 0.0019569471
    %v121 = vmul.f32 %v117, 0.0019569471
    %v122 = vmul.f32 %v118, 0.0019569471
    %v123 = vmul.f32 %v119, 0.0019569471
    %v124 = vrsqrt.pop %v120
    %v125 = vmul.f32 %v124, %v120
    %v126 = vmul.f32 %v125, %v124
    %v127 = vmul.f32 0.5, %v126
    %v128 = vsub.f32 1.5, %v127
    %v129 = vmul.f32 %v124, %v128
    %v130 = vmul.f32 %v120, %v129
    %vm131 = vcmp.eq.f32.partialorder %v120, inf
    %v132 = vsel %vm131, %v120, %v130
    %vm133 = vcmp.eq.f32.partialorder %v120, 0.0
    %v134 = vand.u32 %v120, 2147483648
    %v135 = vsel %vm133, %v134, %v132
    %v136 = vrsqrt.pop %v121
    %v137 = vmul.f32 %v136, %v121
    %v138 = vmul.f32 %v137, %v136
    %v139 = vmul.f32 0.5, %v138
    %v140 = vsub.f32 1.5, %v139
    %v141 = vmul.f32 %v136, %v140
    %v142 = vmul.f32 %v121, %v141
    %vm143 = vcmp.eq.f32.partialorder %v121, inf
    %v144 = vsel %vm143, %v121, %v142
    %vm145 = vcmp.eq.f32.partialorder %v121, 0.0
    %v146 = vand.u32 %v121, 2147483648
    %v147 = vsel %vm145, %v146, %v144
    %v148 = vrsqrt.pop %v122
    %v149 = vmul.f32 %v148, %v122
    %v150 = vmul.f32 %v149, %v148
    %v151 = vmul.f32 0.5, %v150
    %v152 = vsub.f32 1.5, %v151
    %v153 = vmul.f32 %v148, %v152
    %v154 = vmul.f32 %v122, %v153
    %vm155 = vcmp.eq.f32.partialorder %v122, inf
    %v156 = vsel %vm155, %v122, %v154
    %vm157 = vcmp.eq.f32.partialorder %v122, 0.0
    %v158 = vand.u32 %v122, 2147483648
    %v159 = vsel %vm157, %v158, %v156
    %v160 = vrsqrt.pop %v123
    %v161 = vmul.f32 %v160, %v123
    %v162 = vmul.f32 %v161, %v160
    %v163 = vmul.f32 0.5, %v162
    %v164 = vsub.f32 1.5, %v163
    %v165 = vmul.f32 %v160, %v164
    %v166 = vmul.f32 %v123, %v165
    %vm167 = vcmp.eq.f32.partialorder %v123, inf
    %v168 = vsel %vm167, %v123, %v166
    %vm169 = vcmp.eq.f32.partialorder %v123, 0.0
    %v170 = vand.u32 %v123, 2147483648
    %v171 = vsel %vm169, %v170, %v168
    %v172 = vadd.f32 %v135, 1e-10
    %v173 = vadd.f32 %v147, 1e-10
    %v174 = vadd.f32 %v159, 1e-10
    %v175 = vadd.f32 %v171, 1e-10
    %v176 = vrcp.pop %v172
    %v177 = vmul.f32 %v172, %v176
    %v178 = vsub.f32 1.0, %v177
    %v179 = vmul.f32 %v176, %v178
    %v180 = vadd.f32 %v176, %v179
    %vm181 = vweird.f32 %v172
    %vm182 = vweird.f32 %v176
    %vm183 = vmor %vm181, %vm182
    %v184 = vsel %vm183, %v176, %v180
    %v185 = vand.u32 2147483647, %v172
    %vm186 = vcmp.eq.f32.partialorder %v185, 8.507059e+37
    %v187 = vand.u32 %v172, 2147483648
    %v188 = vor.u32 1.1754944e-38, %v187
    %v189 = vsel %vm186, %v188, %v184
    %v190 = vrcp.pop %v173
    %v191 = vmul.f32 %v173, %v190
    %v192 = vsub.f32 1.0, %v191
    %v193 = vmul.f32 %v190, %v192
    %v194 = vadd.f32 %v190, %v193
    %vm195 = vweird.f32 %v173
    %vm196 = vweird.f32 %v190
    %vm197 = vmor %vm195, %vm196
    %v198 = vsel %vm197, %v190, %v194
    %v199 = vand.u32 2147483647, %v173
    %vm200 = vcmp.eq.f32.partialorder %v199, 8.507059e+37
    %v201 = vand.u32 %v173, 2147483648
    %v202 = vor.u32 1.1754944e-38, %v201
    %v203 = vsel %vm200, %v202, %v198
    %v204 = vrcp.pop %v174
    %v205 = vmul.f32 %v174, %v204
    %v206 = vsub.f32 1.0, %v205
    %v207 = vmul.f32 %v204, %v206
    %v208 = vadd.f32 %v204, %v207
    %vm209 = vweird.f32 %v174
    %vm210 = vweird.f32 %v204
    %vm211 = vmor %vm209, %vm210
    %v212 = vsel %vm211, %v204, %v208
    %v213 = vand.u32 2147483647, %v174
    %vm214 = vcmp.eq.f32.partialorder %v213, 8.507059e+37
    %v215 = vand.u32 %v174, 2147483648
    %v216 = vor.u32 1.1754944e-38, %v215
    %v217 = vsel %vm214, %v216, %v212
    %v218 = vrcp.pop %v175
    %v219 = vmul.f32 %v175, %v218
    %v220 = vsub.f32 1.0, %v219
    %v221 = vmul.f32 %v218, %v220
    %v222 = vadd.f32 %v218, %v221
    %vm223 = vweird.f32 %v175
    %vm224 = vweird.f32 %v218
    %vm225 = vmor %vm223, %vm224
    %v226 = vsel %vm225, %v218, %v222
    %v227 = vand.u32 2147483647, %v175
    %vm228 = vcmp.eq.f32.partialorder %v227, 8.507059e+37
    %v229 = vand.u32 %v175, 2147483648
    %v230 = vor.u32 1.1754944e-38, %v229
    %v231 = vsel %vm228, %v230, %v226
    %v232 = vld [vmem:[%s1] sm:$0xf]
    %v233 = vld [vmem:[%s1 + $0x4] sm:$0xf]
    %v234 = vmul.f32 %v232, %v189
    %v235 = vmul.f32 %v233, %v203
    %v236 = vmul.f32 %v232, %v217
    %v237 = vmul.f32 %v233, %v231
    %v238 = vld [vmem:[%s2] sm:$0xf]
    %v239 = vld [vmem:[%s2 + $0x4] sm:$0xf]
    %v240 = vmul.f32 %v64, %v234
    %v241 = vmul.f32 %v65, %v235
    %v242 = vmul.f32 %v66, %v236
    %v243 = vmul.f32 %v67, %v237
    %v244 = vsub.f32 %v238, %v240
    %v245 = vsub.f32 %v239, %v241
    %v246 = vsub.f32 %v238, %v242
    %v247 = vsub.f32 %v239, %v243
    %249 = vset.pattern.permute.xlu0 0
    %250 = vperm.xlu0 %249, %v234
    %v251 = vpop.permute.xlu0 %250
    %254 = vset.pattern.permute.xlu0 0
    %255 = vperm.xlu0 %254, %v235
    %v256 = vpop.permute.xlu0 %255
    %259 = vset.pattern.permute.xlu0 0
    %260 = vperm.xlu0 %259, %v236
    %v261 = vpop.permute.xlu0 %260
    %264 = vset.pattern.permute.xlu0 0
    %265 = vperm.xlu0 %264, %v237
    %v266 = vpop.permute.xlu0 %265
    %v268 = vmul.f32 %v15, %v251
    %v269 = vmul.f32 %v16, %v256
    %v270 = vmul.f32 %v17, %v261
    %v271 = vmul.f32 %v18, %v266
    %273 = vset.pattern.permute.xlu0 0
    %274 = vperm.xlu0 %273, %v244
    %v275 = vpop.permute.xlu0 %274
    %278 = vset.pattern.permute.xlu0 0
    %279 = vperm.xlu0 %278, %v245
    %v280 = vpop.permute.xlu0 %279
    %283 = vset.pattern.permute.xlu0 0
    %284 = vperm.xlu0 %283, %v246
    %v285 = vpop.permute.xlu0 %284
    %288 = vset.pattern.permute.xlu0 0
    %289 = vperm.xlu0 %288, %v247
    %v290 = vpop.permute.xlu0 %289
    %v292 = vadd.f32 %v268, %v275
    %v293 = vadd.f32 %v269, %v280
    %v294 = vadd.f32 %v270, %v285
    %v295 = vadd.f32 %v271, %v290
    %296 = vst [vmem:[#allocation2] sm:$0xf] %v292
    %297 = vst [vmem:[#allocation2 + $0x4] sm:$0xf] %v293
    %298 = vst [vmem:[#allocation2 + $0x8] sm:$0xf] %v294
    %299 = vst [vmem:[#allocation2 + $0xc] sm:$0xf] %v295
    // Predicated region
    $region14: #{tpu_custom_call.1} parent=1 // pred_check
      _
    $region15: #{tpu_custom_call.1} parent=1 // pred_check_branch
      %301 = sbr.rel (0) target = $region17
    $region16: #{tpu_custom_call.1} parent=1 // pred_region
      %303 = vsyncadd [#allocation3], 0
      %s304 = sshll.u32 [#allocation2], 4
      %s305 = int_to_ptr.vmem [resolvable:$true] %s304
      %s306 = sshll.u32 %s3, 4
      %s307 = int_to_ptr.hbm [resolvable:$true] %s306
      %312 = dma.vmem_to_hbm [thread:$0]  %s305, 256, %s307, [#allocation3], 64, 64, 4
    $region17: #{tpu_custom_call.1} parent=1 // pred_fallthru
      _
    // Predicated region
    $region18: #{tpu_custom_call.1} parent=1 // pred_check
      _
    $region19: #{tpu_custom_call.1} parent=1 // pred_check_branch
      %314 = sbr.rel (0) target = $region21
    $region20: #{tpu_custom_call.1} parent=1 // pred_region
      %316 = dma.done [#allocation3], 256
    $region21: #{tpu_custom_call.1} parent=1 // pred_fallthru
      _
    %317 = vsyncpa [#allocation3], 1

</llo_original>
